<compile_context>
chip_gen: v5e
topology: v5e:2x2
jax: 0.10.0
libtpu: 0.0.40
codegen_flags: <defaults>
</compile_context>

<pallas_src>
import jax
import jax.numpy as jnp
from jax.experimental import pallas as pl
from jax.experimental.pallas import tpu as pltpu


def mlp_omics_kernel(x_ref, w1_ref, b1_ref, w2_ref, b2_ref, w3_ref, b3_ref,
                     out_ref):
    x = x_ref[...]                                               # (TB, D)

    # net: Linear -> ReLU -> (Dropout = id) -> Linear -> ReLU -> (Dropout = id)
    h = jnp.maximum(
        jnp.dot(x, w1_ref[...], preferred_element_type=jnp.float32)
        + b1_ref[...], 0.0)                                      # (TB, H)
    h = jnp.maximum(
        jnp.dot(h, w2_ref[...], preferred_element_type=jnp.float32)
        + b2_ref[...], 0.0)                                      # (TB, H)

    # to_logits, with W3/b3 duplicated along the output axis by the wrapper:
    # logits2[:, 0:C] == logits2[:, C:2C] == logits.
    logits2 = (jnp.dot(h, w3_ref[...], preferred_element_type=jnp.float32)
               + b3_ref[...])                                    # (TB, 2C)
    two_c = logits2.shape[-1]
    c = two_c // 2

    hazards2 = jax.nn.sigmoid(logits2)      # lanes [0,C): hazards (rest: copy)
    one_minus = jax.nn.sigmoid(-logits2)    # == 1 - sigmoid(logits), safer form

    # Inclusive prefix product placed in lanes [C, 2C):
    #   s[:, C+j] = prod_{t<=j} one_minus[:, t]
    # Built lane-dense with broadcast columns + lane-mask selects: no
    # single-lane stores, no rolls/concats, only VPU work on an 8-lane tile.
    lane = jax.lax.broadcasted_iota(jnp.int32, logits2.shape, 1)
    s = jnp.broadcast_to(one_minus[:, 0:1], logits2.shape)       # t = 0 term
    for t in range(1, c):                    # static; C is small (default 4)
        col = jnp.broadcast_to(one_minus[:, t:t + 1], logits2.shape)
        s = s * jnp.where(lane >= c + t, col, 1.0)

    # Packed output tile, assembled in registers, stored ONCE:
    #   lanes [0, C)  -> hazards
    #   lanes [C, 2C) -> S = cumprod(1 - hazards)
    out_ref[...] = jnp.where(lane < c, hazards2, s)


def _round_up(x, m):
    return (x + m - 1) // m * m


def _cdiv(a, b):
    return -(-a // b)


def mlp_omics_forward(x_omic, params):
    """Mirrors MLPOmics.forward: returns (hazards, S, Y_hat, None, None).

    Accepts a single sample ((input_dim,) or (1, input_dim), as the torch
    module does) or a stack of samples (B, input_dim); all rows share the
    same weights and go through one batched pallas_call.
    """
    w1, b1, w2, b2, w3, b3 = params

    x = jnp.asarray(x_omic, jnp.float32)
    x = jnp.squeeze(x)                      # torch .squeeze()
    if x.ndim == 1:
        x = x[None, :]                      # single sample -> (1, input_dim)

    B, D = x.shape
    H = w1.shape[1]
    C = w3.shape[1]

    # Host-side (one-time) duplication of the last layer so the kernel's final
    # matmul directly emits a 2C-wide tile (logits in both halves).
    w3p = jnp.concatenate([w3, w3], axis=1)          # (H, 2C)
    b3p = jnp.concatenate([b3, b3])[None, :]         # (1, 2C)

    # Row tiling: balanced blocks, sublane-aligned, TB <= 256; at least two
    # blocks once B >= 16 so v7x's two TensorCores both get work.
    MAX_TB = 256
    n_blk = max(_cdiv(B, MAX_TB), 2 if B >= 16 else 1)
    TB = _round_up(_cdiv(B, n_blk), 8)
    B_pad = n_blk * TB
    if B_pad != B:
        x = jnp.concatenate(
            [x, jnp.zeros((B_pad - B, D), jnp.float32)], axis=0)

    grid = (n_blk,)

    packed = pl.pallas_call(
        mlp_omics_kernel,
        out_shape=jax.ShapeDtypeStruct((B_pad, 2 * C), jnp.float32),
        grid_spec=pltpu.PrefetchScalarGridSpec(
            num_scalar_prefetch=0,
            grid=grid,
            in_specs=[
                pl.BlockSpec((TB, D), lambda i: (i, 0)),   # activations: tiled
                pl.BlockSpec((D, H), lambda i: (0, 0)),    # weights: resident
                pl.BlockSpec((1, H), lambda i: (0, 0)),
                pl.BlockSpec((H, H), lambda i: (0, 0)),
                pl.BlockSpec((1, H), lambda i: (0, 0)),
                pl.BlockSpec((H, 2 * C), lambda i: (0, 0)),
                pl.BlockSpec((1, 2 * C), lambda i: (0, 0)),
            ],
            out_specs=pl.BlockSpec((TB, 2 * C), lambda i: (i, 0)),
        ),
        compiler_params=pltpu.CompilerParams(
            dimension_semantics=("parallel",)),   # 2x on v7x (2 TCs); no-op v5e/v6e
    )(x, w1, b1[None, :], w2, b2[None, :], w3p, b3p)

    hazards = packed[:B, 0:C]
    S = packed[:B, C:2 * C]
    # torch.topk(logits, 1, dim=1)[1]; sigmoid is monotone so argmax(hazards)
    # gives the identical index (first index on exact ties).
    Y_hat = jnp.argmax(hazards, axis=1, keepdims=True).astype(jnp.int32)
    return hazards, S, Y_hat, None, None


def reference_forward(x_omic, params):
    """Pure-JAX (XLA) reference of the same forward, for correctness checks."""
    w1, b1, w2, b2, w3, b3 = params
    x = jnp.asarray(x_omic, jnp.float32)
    x = jnp.squeeze(x)
    if x.ndim == 1:
        x = x[None, :]
    h = jax.nn.relu(x @ w1 + b1)
    h = jax.nn.relu(h @ w2 + b2)
    logits = h @ w3 + b3
    hazards = jax.nn.sigmoid(logits)
    S = jnp.cumprod(1.0 - hazards, axis=1)
    Y_hat = jnp.argmax(hazards, axis=1, keepdims=True).astype(jnp.int32)
    return hazards, S, Y_hat


def init_params(key, input_dim, projection_dim, n_classes):
    """Deterministic synthetic parameters (shapes per MLPOmics.__init__)."""
    hidden = projection_dim // 2
    k1, k2, k3, k4, k5, k6 = jax.random.split(key, 6)
    w1 = jax.random.normal(k1, (input_dim, hidden), jnp.float32) * 0.1
    b1 = jax.random.normal(k2, (hidden,), jnp.float32) * 0.1
    w2 = jax.random.normal(k3, (hidden, hidden), jnp.float32) * 0.1
    b2 = jax.random.normal(k4, (hidden,), jnp.float32) * 0.1
    w3 = jax.random.normal(k5, (hidden, n_classes), jnp.float32) * 0.1
    b3 = jax.random.normal(k6, (n_classes,), jnp.float32) * 0.1
    return (w1, b1, w2, b2, w3, b3)


if __name__ == "__main__":
    input_dim = 32
    projection_dim = 32   # hidden = 16
    n_classes = 4
    batch = 8             # stacked samples to amortize launch / fill sublanes

    key = jax.random.PRNGKey(0)
    pkey, xkey1, xkey2, xkey3 = jax.random.split(key, 4)
    params = init_params(pkey, input_dim, projection_dim, n_classes)

    # 1) Single-sample call, exactly how the torch module is used.
    x_single = jax.random.normal(xkey1, (1, input_dim), jnp.float32)
    hazards1, S1, Yhat1, _, _ = mlp_omics_forward(x_single, params)

    # 2) Batched call (the performance path): samples stacked on the row axis.
    x_batch = jax.random.normal(xkey2, (batch, input_dim), jnp.float32)
    hazardsB, SB, YhatB, _, _ = mlp_omics_forward(x_batch, params)

    # 3) A larger batch to exercise the multi-block (>=2 grid steps) path.
    x_big = jax.random.normal(xkey3, (300, input_dim), jnp.float32)
    hazardsL, SL, YhatL, _, _ = mlp_omics_forward(x_big, params)

    jax.block_until_ready((hazards1, S1, Yhat1, hazardsB, SB, YhatB,
                           hazardsL, SL, YhatL))

    assert hazards1.shape == (1, n_classes)
    assert S1.shape == (1, n_classes)
    assert Yhat1.shape == (1, 1)
    assert hazardsB.shape == (batch, n_classes)
    assert SB.shape == (batch, n_classes)
    assert YhatB.shape == (batch, 1)
    assert hazardsL.shape == (300, n_classes)

    rh, rs, ry = reference_forward(x_batch, params)
    assert jnp.allclose(hazardsB, rh, atol=1e-3, rtol=1e-3)
    assert jnp.allclose(SB, rs, atol=1e-3, rtol=1e-3)
    assert bool(jnp.all(YhatB == ry))

    rhL, rsL, ryL = reference_forward(x_big, params)
    assert jnp.allclose(hazardsL, rhL, atol=1e-3, rtol=1e-3)
    assert jnp.allclose(SL, rsL, atol=1e-3, rtol=1e-3)
    assert bool(jnp.all(YhatL == ryL))

    print("KERNEL_OK")
</pallas_src>

<mosaic_0001>
module attributes {stable_mosaic.version = 11 : i64} {
  func.func @mlp_omics_kernel(%arg0: i32, %arg1: memref<8x32xf32, #tpu.memory_space<vmem>>, %arg2: memref<32x16xf32, #tpu.memory_space<vmem>>, %arg3: memref<1x16xf32, #tpu.memory_space<vmem>>, %arg4: memref<16x16xf32, #tpu.memory_space<vmem>>, %arg5: memref<1x16xf32, #tpu.memory_space<vmem>>, %arg6: memref<16x8xf32, #tpu.memory_space<vmem>>, %arg7: memref<1x8xf32, #tpu.memory_space<vmem>>, %arg8: memref<8x8xf32, #tpu.memory_space<vmem>>) attributes {dimension_semantics = [#tpu.dimension_semantics<parallel>], iteration_bounds = array<i64: 1>, scalar_prefetch = 0 : i64, scratch_operands = 0 : i64, tpu.core_type = #tpu.core_type<tc>, window_params = [{transform_indices = @transform_0, window_bounds = array<i64: 8, 32>}, {pipeline_mode = #tpu.pipeline_mode<synchronous>, transform_indices = @transform_1, window_bounds = array<i64: 32, 16>}, {pipeline_mode = #tpu.pipeline_mode<synchronous>, transform_indices = @transform_2, window_bounds = array<i64: 1, 16>}, {pipeline_mode = #tpu.pipeline_mode<synchronous>, transform_indices = @transform_3, window_bounds = array<i64: 16, 16>}, {pipeline_mode = #tpu.pipeline_mode<synchronous>, transform_indices = @transform_4, window_bounds = array<i64: 1, 16>}, {pipeline_mode = #tpu.pipeline_mode<synchronous>, transform_indices = @transform_5, window_bounds = array<i64: 16, 8>}, {pipeline_mode = #tpu.pipeline_mode<synchronous>, transform_indices = @transform_6, window_bounds = array<i64: 1, 8>}, {transform_indices = @transform_7, window_bounds = array<i64: 8, 8>}]} {
    %c0 = arith.constant 0 : index
    %c0_0 = arith.constant 0 : index
    %0 = vector.load %arg1[%c0, %c0_0] : memref<8x32xf32, #tpu.memory_space<vmem>>, vector<8x32xf32>
    %c0_1 = arith.constant 0 : index
    %c0_2 = arith.constant 0 : index
    %1 = vector.load %arg2[%c0_1, %c0_2] : memref<32x16xf32, #tpu.memory_space<vmem>>, vector<32x16xf32>
    %cst = arith.constant dense<0.000000e+00> : vector<8x16xf32>
    %2 = tpu.matmul %0, %1, %cst {dimension_numbers = #tpu.dot_dimension_numbers<[1], [0], [0], [1], [0, 0, 1, 1], [], []>} : vector<8x32xf32>, vector<32x16xf32>, vector<8x16xf32> -> vector<8x16xf32>
    %c0_3 = arith.constant 0 : index
    %c0_4 = arith.constant 0 : index
    %3 = vector.load %arg3[%c0_3, %c0_4] : memref<1x16xf32, #tpu.memory_space<vmem>>, vector<1x16xf32>
    %4 = vector.broadcast %3 : vector<1x16xf32> to vector<8x16xf32>
    %5 = arith.addf %2, %4 : vector<8x16xf32>
    %cst_5 = arith.constant 0.000000e+00 : f32
    %6 = vector.broadcast %cst_5 : f32 to vector<8x16xf32>
    %7 = arith.maximumf %5, %6 : vector<8x16xf32>
    %c0_6 = arith.constant 0 : index
    %c0_7 = arith.constant 0 : index
    %8 = vector.load %arg4[%c0_6, %c0_7] : memref<16x16xf32, #tpu.memory_space<vmem>>, vector<16x16xf32>
    %cst_8 = arith.constant dense<0.000000e+00> : vector<8x16xf32>
    %9 = tpu.matmul %7, %8, %cst_8 {dimension_numbers = #tpu.dot_dimension_numbers<[1], [0], [0], [1], [0, 0, 1, 1], [], []>} : vector<8x16xf32>, vector<16x16xf32>, vector<8x16xf32> -> vector<8x16xf32>
    %c0_9 = arith.constant 0 : index
    %c0_10 = arith.constant 0 : index
    %10 = vector.load %arg5[%c0_9, %c0_10] : memref<1x16xf32, #tpu.memory_space<vmem>>, vector<1x16xf32>
    %11 = vector.broadcast %10 : vector<1x16xf32> to vector<8x16xf32>
    %12 = arith.addf %9, %11 : vector<8x16xf32>
    %cst_11 = arith.constant 0.000000e+00 : f32
    %13 = vector.broadcast %cst_11 : f32 to vector<8x16xf32>
    %14 = arith.maximumf %12, %13 : vector<8x16xf32>
    %c0_12 = arith.constant 0 : index
    %c0_13 = arith.constant 0 : index
    %15 = vector.load %arg6[%c0_12, %c0_13] : memref<16x8xf32, #tpu.memory_space<vmem>>, vector<16x8xf32>
    %cst_14 = arith.constant dense<0.000000e+00> : vector<8x8xf32>
    %16 = tpu.matmul %14, %15, %cst_14 {dimension_numbers = #tpu.dot_dimension_numbers<[1], [0], [0], [1], [0, 0, 1, 1], [], []>} : vector<8x16xf32>, vector<16x8xf32>, vector<8x8xf32> -> vector<8x8xf32>
    %c0_15 = arith.constant 0 : index
    %c0_16 = arith.constant 0 : index
    %17 = vector.load %arg7[%c0_15, %c0_16] : memref<1x8xf32, #tpu.memory_space<vmem>>, vector<1x8xf32>
    %18 = vector.broadcast %17 : vector<1x8xf32> to vector<8x8xf32>
    %19 = arith.addf %16, %18 : vector<8x8xf32>
    %20 = arith.negf %19 : vector<8x8xf32>
    %21 = math.exp %20 : vector<8x8xf32>
    %cst_17 = arith.constant 1.000000e+00 : f32
    %22 = vector.broadcast %cst_17 : f32 to vector<8x8xf32>
    %23 = arith.addf %22, %21 : vector<8x8xf32>
    %24 = arith.divf %22, %23 : vector<8x8xf32>
    %cst_18 = arith.constant 0.000000e+00 : f32
    %25 = vector.broadcast %cst_18 : f32 to vector<8x8xf32>
    %26 = arith.subf %25, %19 : vector<8x8xf32>
    %27 = arith.negf %26 : vector<8x8xf32>
    %28 = math.exp %27 : vector<8x8xf32>
    %cst_19 = arith.constant 1.000000e+00 : f32
    %29 = vector.broadcast %cst_19 : f32 to vector<8x8xf32>
    %30 = arith.addf %29, %28 : vector<8x8xf32>
    %31 = arith.divf %29, %30 : vector<8x8xf32>
    %32 = tpu.iota {dimensions = array<i32: 1>} : vector<8x8xi32>
    %33 = vector.extract_strided_slice %31 {offsets = [0, 0], sizes = [8, 1], strides = [1, 1]} : vector<8x8xf32> to vector<8x1xf32>
    %34 = vector.shape_cast %33 : vector<8x1xf32> to vector<8x1xf32>
    %35 = vector.broadcast %34 : vector<8x1xf32> to vector<8x8xf32>
    %36 = vector.extract_strided_slice %31 {offsets = [0, 1], sizes = [8, 1], strides = [1, 1]} : vector<8x8xf32> to vector<8x1xf32>
    %37 = vector.shape_cast %36 : vector<8x1xf32> to vector<8x1xf32>
    %38 = vector.broadcast %37 : vector<8x1xf32> to vector<8x8xf32>
    %c5_i32 = arith.constant 5 : i32
    %39 = vector.broadcast %c5_i32 : i32 to vector<8x8xi32>
    %40 = arith.cmpi sge, %32, %39 : vector<8x8xi32>
    %cst_20 = arith.constant 1.000000e+00 : f32
    %41 = vector.broadcast %cst_20 : f32 to vector<8x8xf32>
    %42 = arith.select %40, %38, %41 : vector<8x8xi1>, vector<8x8xf32>
    %43 = arith.mulf %35, %42 : vector<8x8xf32>
    %44 = vector.extract_strided_slice %31 {offsets = [0, 2], sizes = [8, 1], strides = [1, 1]} : vector<8x8xf32> to vector<8x1xf32>
    %45 = vector.shape_cast %44 : vector<8x1xf32> to vector<8x1xf32>
    %46 = vector.broadcast %45 : vector<8x1xf32> to vector<8x8xf32>
    %c6_i32 = arith.constant 6 : i32
    %47 = vector.broadcast %c6_i32 : i32 to vector<8x8xi32>
    %48 = arith.cmpi sge, %32, %47 : vector<8x8xi32>
    %cst_21 = arith.constant 1.000000e+00 : f32
    %49 = vector.broadcast %cst_21 : f32 to vector<8x8xf32>
    %50 = arith.select %48, %46, %49 : vector<8x8xi1>, vector<8x8xf32>
    %51 = arith.mulf %43, %50 : vector<8x8xf32>
    %52 = vector.extract_strided_slice %31 {offsets = [0, 3], sizes = [8, 1], strides = [1, 1]} : vector<8x8xf32> to vector<8x1xf32>
    %53 = vector.shape_cast %52 : vector<8x1xf32> to vector<8x1xf32>
    %54 = vector.broadcast %53 : vector<8x1xf32> to vector<8x8xf32>
    %c7_i32 = arith.constant 7 : i32
    %55 = vector.broadcast %c7_i32 : i32 to vector<8x8xi32>
    %56 = arith.cmpi sge, %32, %55 : vector<8x8xi32>
    %cst_22 = arith.constant 1.000000e+00 : f32
    %57 = vector.broadcast %cst_22 : f32 to vector<8x8xf32>
    %58 = arith.select %56, %54, %57 : vector<8x8xi1>, vector<8x8xf32>
    %59 = arith.mulf %51, %58 : vector<8x8xf32>
    %c4_i32 = arith.constant 4 : i32
    %60 = vector.broadcast %c4_i32 : i32 to vector<8x8xi32>
    %61 = arith.cmpi slt, %32, %60 : vector<8x8xi32>
    %62 = arith.select %61, %24, %59 : vector<8x8xi1>, vector<8x8xf32>
    %c0_23 = arith.constant 0 : index
    %c0_24 = arith.constant 0 : index
    %63 = vector.load %arg8[%c0_23, %c0_24] : memref<8x8xf32, #tpu.memory_space<vmem>>, vector<8x8xf32>
    tpu.vector_store %arg8[%c0_23, %c0_24], %62 {strides = array<i32>} : memref<8x8xf32, #tpu.memory_space<vmem>>, vector<8x8xf32>,
    return
  }
  func.func @transform_0(%arg0: i32) -> (i32, i32) {
    %c0_i32 = arith.constant 0 : i32
    %c0_i32_0 = arith.constant 0 : i32
    return %arg0, %c0_i32 : i32, i32
  }
  func.func @transform_1(%arg0: i32) -> (i32, i32) {
    %c0_i32 = arith.constant 0 : i32
    %c0_i32_0 = arith.constant 0 : i32
    %c0_i32_1 = arith.constant 0 : i32
    return %c0_i32, %c0_i32_0 : i32, i32
  }
  func.func @transform_2(%arg0: i32) -> (i32, i32) {
    %c0_i32 = arith.constant 0 : i32
    %c0_i32_0 = arith.constant 0 : i32
    %c0_i32_1 = arith.constant 0 : i32
    return %c0_i32, %c0_i32_0 : i32, i32
  }
  func.func @transform_3(%arg0: i32) -> (i32, i32) {
    %c0_i32 = arith.constant 0 : i32
    %c0_i32_0 = arith.constant 0 : i32
    %c0_i32_1 = arith.constant 0 : i32
    return %c0_i32, %c0_i32_0 : i32, i32
  }
  func.func @transform_4(%arg0: i32) -> (i32, i32) {
    %c0_i32 = arith.constant 0 : i32
    %c0_i32_0 = arith.constant 0 : i32
    %c0_i32_1 = arith.constant 0 : i32
    return %c0_i32, %c0_i32_0 : i32, i32
  }
  func.func @transform_5(%arg0: i32) -> (i32, i32) {
    %c0_i32 = arith.constant 0 : i32
    %c0_i32_0 = arith.constant 0 : i32
    %c0_i32_1 = arith.constant 0 : i32
    return %c0_i32, %c0_i32_0 : i32, i32
  }
  func.func @transform_6(%arg0: i32) -> (i32, i32) {
    %c0_i32 = arith.constant 0 : i32
    %c0_i32_0 = arith.constant 0 : i32
    %c0_i32_1 = arith.constant 0 : i32
    return %c0_i32, %c0_i32_0 : i32, i32
  }
  func.func @transform_7(%arg0: i32) -> (i32, i32) {
    %c0_i32 = arith.constant 0 : i32
    %c0_i32_0 = arith.constant 0 : i32
    return %arg0, %c0_i32 : i32, i32
  }
}

</mosaic_0001>

<llo_original>
// kernel: tpu_custom_call.1
$region0: #{tpu_custom_call.1}
  #allocation0 [shape = 'u32[]', space=smem, size = 0x4, offset = 0x4, fixed_abs, tag = 'smem constant byte address 0x4 - core index']
  #allocation1 [shape = 'u32[72,128]{1,0:T(1,128)}', space=vmem, size = 0x9000, scoped, tag = 'internal scratch']
  %s0 = inlined_call_operand.vmem [shape: f32[8,32], index: 0, kind: input, shape index: {}]
  %s1 = inlined_call_operand.vmem [shape: f32[32,16], index: 1, kind: input, shape index: {}]
  %s2 = inlined_call_operand.vmem [shape: f32[1,16], index: 2, kind: input, shape index: {}]
  %s3 = inlined_call_operand.vmem [shape: f32[16,16], index: 3, kind: input, shape index: {}]
  %s4 = inlined_call_operand.vmem [shape: f32[1,16], index: 4, kind: input, shape index: {}]
  %s5 = inlined_call_operand.vmem [shape: f32[16,8], index: 5, kind: input, shape index: {}]
  %s6 = inlined_call_operand.vmem [shape: f32[1,8], index: 6, kind: input, shape index: {}]
  %s7 = inlined_call_operand.hbm [shape: f32[8,8], index: 7, kind: output, shape index: {}]
  %s8 = sld [smem:[#allocation0]]
  $region38: #{tpu_custom_call.1} parent=0
    _
  %s10 = ssub.s32 1, %s8
  %s11 = scalar_select 0, %s10, %s8
  $region1: #{tpu_custom_call.1} parent=0
    #allocation2 [shape = 'u8[4096]{0}', space=vmem, size = 0x1000, scoped, tag = 'output window, operand 0, single buffered']
    #allocation3 [shape = 's32[1]{0}', space=sflag, size = 0x4, scoped, tag = 'scoped memory for tpu_custom_call.1']
    %12 = vsyncpa [#allocation3], 0
    // Predicated region
    $region2: #{tpu_custom_call.1} parent=1 // pred_check
      _
    $region3: #{tpu_custom_call.1} parent=1 // pred_check_branch
      %14 = sbr.rel (0) target = $region5
    $region4: #{tpu_custom_call.1} parent=1 // pred_region
      _
    $region5: #{tpu_custom_call.1} parent=1 // pred_fallthru
      _
    // Predicated region
    $region6: #{tpu_custom_call.1} parent=1 // pred_check
      _
    $region7: #{tpu_custom_call.1} parent=1 // pred_check_branch
      %16 = sbr.rel (0) target = $region9
    $region8: #{tpu_custom_call.1} parent=1 // pred_region
      _
    $region9: #{tpu_custom_call.1} parent=1 // pred_fallthru
      _
    // Predicated region
    $region10: #{tpu_custom_call.1} parent=1 // pred_check
      _
    $region11: #{tpu_custom_call.1} parent=1 // pred_check_branch
      %18 = sbr.rel (0) target = $region13
    $region12: #{tpu_custom_call.1} parent=1 // pred_region
      _
    $region13: #{tpu_custom_call.1} parent=1 // pred_fallthru
      _
    // Predicated region
    $region14: #{tpu_custom_call.1} parent=1 // pred_check
      _
    $region15: #{tpu_custom_call.1} parent=1 // pred_check_branch
      %20 = sbr.rel (0) target = $region17
    $region16: #{tpu_custom_call.1} parent=1 // pred_region
      _
    $region17: #{tpu_custom_call.1} parent=1 // pred_fallthru
      _
    // Predicated region
    $region18: #{tpu_custom_call.1} parent=1 // pred_check
      _
    $region19: #{tpu_custom_call.1} parent=1 // pred_check_branch
      %22 = sbr.rel (0) target = $region21
    $region20: #{tpu_custom_call.1} parent=1 // pred_region
      _
    $region21: #{tpu_custom_call.1} parent=1 // pred_fallthru
      _
    // Predicated region
    $region22: #{tpu_custom_call.1} parent=1 // pred_check
      _
    $region23: #{tpu_custom_call.1} parent=1 // pred_check_branch
      %24 = sbr.rel (0) target = $region25
    $region24: #{tpu_custom_call.1} parent=1 // pred_region
      _
    $region25: #{tpu_custom_call.1} parent=1 // pred_fallthru
      _
    // Predicated region
    $region26: #{tpu_custom_call.1} parent=1 // pred_check
      _
    $region27: #{tpu_custom_call.1} parent=1 // pred_check_branch
      %26 = sbr.rel (0) target = $region29
    $region28: #{tpu_custom_call.1} parent=1 // pred_region
      _
    $region29: #{tpu_custom_call.1} parent=1 // pred_fallthru
      _
    %v27 = vld [vmem:[%s0] sm:$0xff]
    %v28 = vld [vmem:[%s1] sm:$0xff]
    %v29 = vld [vmem:[%s1 + $0x8] sm:$0xff]
    %v30 = vld [vmem:[%s1 + $0x10] sm:$0xff]
    %v31 = vld [vmem:[%s1 + $0x18] sm:$0xff]
    %v32 = vld [vmem:[%s2] sm:$0x1]
    %v34 = vperm.slane %v32, 0
    %vm36 = vcmask 261120
    %v38 = vsel %vm36, %v27, 0
    %40 = vmatpush.msra.mxu0 0.0
    %41 = vmatpush.msra.mxu0 0.0
    %42 = vmatpush.msra.mxu0 0.0
    %43 = vmatpush.msra.mxu0 0.0
    %44 = vmatpush.msra.mxu0 0.0
    %45 = vmatpush.msra.mxu0 0.0
    %46 = vmatpush.msra.mxu0 0.0
    %47 = vmatpush.msra.mxu0 0.0
    %48 = vmatpush.msra.mxu0 0.0
    %49 = vmatpush.msra.mxu0 0.0
    %50 = vmatpush.msra.mxu0 0.0
    %51 = vmatpush.msra.mxu0 0.0
    %52 = vmatpush.msra.mxu0 %v31
    %53 = vmatpush.msra.mxu0 %v30
    %54 = vmatpush.msra.mxu0 %v29
    %55 = vmatpush.msra.mxu0 %v28
    %56 = vmatmul.f32.gmra.mxu0 %v38
    %v57 = vpop.f32.mrf.mxu0
    %v58 = vadd.f32 %v34, %v57
    %59 = vdwg.mxu0
    %v60 = vmax.f32 %v58, 0.0
    %v61 = vld [vmem:[%s3] sm:$0xff]
    %v62 = vld [vmem:[%s3 + $0x8] sm:$0xff]
    %v63 = vld [vmem:[%s4] sm:$0x1]
    %v65 = vperm.slane %v63, 0
    %vm67 = vcmask 130048
    %v69 = vsel %vm67, %v60, 0
    %71 = vmatpush.msra.mxu0 0.0
    %72 = vmatpush.msra.mxu0 0.0
    %73 = vmatpush.msra.mxu0 0.0
    %74 = vmatpush.msra.mxu0 0.0
    %75 = vmatpush.msra.mxu0 0.0
    %76 = vmatpush.msra.mxu0 0.0
    %77 = vmatpush.msra.mxu0 0.0
    %78 = vmatpush.msra.mxu0 0.0
    %79 = vmatpush.msra.mxu0 0.0
    %80 = vmatpush.msra.mxu0 0.0
    %81 = vmatpush.msra.mxu0 0.0
    %82 = vmatpush.msra.mxu0 0.0
    %83 = vmatpush.msra.mxu0 0.0
    %84 = vmatpush.msra.mxu0 0.0
    %85 = vmatpush.msra.mxu0 %v62
    %86 = vmatpush.msra.mxu0 %v61
    %87 = vmatmul.f32.gmra.mxu0 %v69
    %v88 = vpop.f32.mrf.mxu0
    %v89 = vadd.f32 %v65, %v88
    %90 = vdwg.mxu0
    %v91 = vmax.f32 %v89, 0.0
    %v92 = vld [vmem:[%s5] sm:$0xff]
    %v93 = vld [vmem:[%s5 + $0x8] sm:$0xff]
    %v94 = vld [vmem:[%s6] sm:$0x1]
    %v96 = vperm.slane %v94, 0
    %v99 = vsel %vm67, %v91, 0
    %101 = vmatpush.msra.mxu0 0.0
    %102 = vmatpush.msra.mxu0 0.0
    %103 = vmatpush.msra.mxu0 0.0
    %104 = vmatpush.msra.mxu0 0.0
    %105 = vmatpush.msra.mxu0 0.0
    %106 = vmatpush.msra.mxu0 0.0
    %107 = vmatpush.msra.mxu0 0.0
    %108 = vmatpush.msra.mxu0 0.0
    %109 = vmatpush.msra.mxu0 0.0
    %110 = vmatpush.msra.mxu0 0.0
    %111 = vmatpush.msra.mxu0 0.0
    %112 = vmatpush.msra.mxu0 0.0
    %113 = vmatpush.msra.mxu0 0.0
    %114 = vmatpush.msra.mxu0 0.0
    %115 = vmatpush.msra.mxu0 %v93
    %116 = vmatpush.msra.mxu0 %v92
    %117 = vmatmul.f32.gmra.mxu0 %v99
    %v118 = vpop.f32.mrf.mxu0
    %v119 = vadd.f32 %v96, %v118
    %120 = vdwg.mxu0
    %v121 = vxor.u32 %v119, 2147483648
    %v122 = vmul.f32 %v121, 1.442695
    %v123 = vpow.pop %v122
    %v124 = vadd.f32 %v123, 1.0
    %v125 = vrcp.pop %v124
    %v126 = vmul.f32 %v124, %v125
    %v127 = vsub.f32 1.0, %v126
    %v128 = vmul.f32 %v125, %v127
    %v129 = vadd.f32 %v125, %v128
    %vm130 = vweird.f32 %v124
    %vm131 = vweird.f32 %v125
    %vm132 = vmor %vm130, %vm131
    %v133 = vsel %vm132, %v125, %v129
    %v134 = vand.u32 2147483647, %v124
    %vm135 = vcmp.eq.f32.partialorder %v134, 8.507059e+37
    %v136 = vand.u32 %v124, 2147483648
    %v137 = vor.u32 1.1754944e-38, %v136
    %v138 = vsel %vm135, %v137, %v133
    %v139 = vmul.f32 1.0, %v138
    %v140 = vsub.f32 0.0, %v119
    %v141 = vxor.u32 %v140, 2147483648
    %v142 = vmul.f32 %v141, 1.442695
    %v143 = vpow.pop %v142
    %v144 = vadd.f32 %v143, 1.0
    %v145 = vrcp.pop %v144
    %v146 = vmul.f32 %v144, %v145
    %v147 = vsub.f32 1.0, %v146
    %v148 = vmul.f32 %v145, %v147
    %v149 = vadd.f32 %v145, %v148
    %vm150 = vweird.f32 %v144
    %vm151 = vweird.f32 %v145
    %vm152 = vmor %vm150, %vm151
    %v153 = vsel %vm152, %v145, %v149
    %v154 = vand.u32 2147483647, %v144
    %vm155 = vcmp.eq.f32.partialorder %v154, 8.507059e+37
    %v156 = vand.u32 %v144, 2147483648
    %v157 = vor.u32 1.1754944e-38, %v156
    %v158 = vsel %vm155, %v157, %v153
    %v159 = vmul.f32 1.0, %v158
    %v160 = vlaneseq
    %v161 = vand.u32 %v160, 127
    %163 = vset.pattern.permute.xlu0 0
    %164 = vperm.xlu0 %163, %v159
    %v165 = vpop.permute.xlu0 %164
    %167 = vset.pattern.permute.xlu0 1
    %168 = vperm.xlu0 %167, %v159
    %v169 = vpop.permute.xlu0 %168
    %vm171 = vcmp.ge.s32.totalorder %v161, 5
    %v172 = vsel %vm171, %v169, 1.0
    %v173 = vmul.f32 %v165, %v172
    %174 = vset.pattern.permute.xlu0 2
    %175 = vperm.xlu0 %174, %v159
    %v176 = vpop.permute.xlu0 %175
    %vm178 = vcmp.ge.s32.totalorder %v161, 6
    %v179 = vsel %vm178, %v176, 1.0
    %v180 = vmul.f32 %v173, %v179
    %181 = vset.pattern.permute.xlu0 3
    %182 = vperm.xlu0 %181, %v159
    %v183 = vpop.permute.xlu0 %182
    %vm185 = vcmp.ge.s32.totalorder %v161, 7
    %v186 = vsel %vm185, %v183, 1.0
    %v187 = vmul.f32 %v180, %v186
    %vm188 = vcmp.lt.s32.totalorder %v161, 4
    %v189 = vsel %vm188, %v139, %v187
    %vm190 = vcmask 64512
    %191 = vst.msk [vmem:[#allocation2] sm:$0xff] %vm190, %v189
    // Predicated region
    $region30: #{tpu_custom_call.1} parent=1 // pred_check
      _
    $region31: #{tpu_custom_call.1} parent=1 // pred_check_branch
      %193 = sbr.rel (0) target = $region33
    $region32: #{tpu_custom_call.1} parent=1 // pred_region
      %195 = vsyncadd [#allocation3], 0
      %s197 = sshll.u32 [#allocation2], 4
      %s198 = int_to_ptr.vmem [resolvable:$true] %s197
      %s199 = sshll.u32 %s7, 4
      %s200 = int_to_ptr.hbm [resolvable:$true] %s199
      %202 = dma.vmem_to_hbm [thread:$0]  %s198, 128, %s200, [#allocation3]
    $region33: #{tpu_custom_call.1} parent=1 // pred_fallthru
      _
    // Predicated region
    $region34: #{tpu_custom_call.1} parent=1 // pred_check
      _
    $region35: #{tpu_custom_call.1} parent=1 // pred_check_branch
      %204 = sbr.rel (0) target = $region37
    $region36: #{tpu_custom_call.1} parent=1 // pred_region
      %206 = dma.done [#allocation3], 128
    $region37: #{tpu_custom_call.1} parent=1 // pred_fallthru
      _
    %207 = vsyncpa [#allocation3], 1

</llo_original>
